<compile_context>
chip_gen: v7x
topology: tpu7x:2x2x1
jax: 0.10.0
libtpu: 0.0.40
codegen_flags: <defaults>
</compile_context>

<pallas_src>
import functools

import jax
import jax.numpy as jnp
from jax.experimental import pallas as pl
from jax.experimental.pallas import tpu as pltpu


def _cnn_kernel(xp_ref, wb_ref, o_ref, *, seq_len, c_in, hidden):
    """xp_ref: (C_in, W + 4) packed input, W = B*L, 2 don't-care halo columns per side.
       wb_ref: (H, 3*C_in + 4*H + 3) packed [w1_k0|w1_k1|w1_k2|w2_k0|w2_k1|w2_k2|wf|b1|b2|bf].
       o_ref : (H, W) channel-major output (lane-dense when W is a multiple of 128)."""
    L, C, H = seq_len, c_in, hidden
    W = o_ref.shape[1]
    Wp = W + 2                       # conv1 computed one column wider on each side

    xp = xp_ref[...]                 # (C, W + 4)
    wb = wb_ref[...]                 # (H, 3C + 4H + 3)

    # Static slices of the packed parameter slab (all within one vreg row span -> cheap).
    off = 0
    w1 = [wb[:, off + k * C: off + (k + 1) * C] for k in range(3)]; off += 3 * C
    w2 = [wb[:, off + k * H: off + (k + 1) * H] for k in range(3)]; off += 3 * H
    wf = wb[:, off: off + H]; off += H
    b1 = wb[:, off: off + 1]
    b2 = wb[:, off + 1: off + 2]
    bf = wb[:, off + 2: off + 3]

    def f32dot(a, b):
        return jnp.dot(a, b, preferred_element_type=jnp.float32)

    # ---- conv1 (k=3, 'same') + ReLU, width W+2 (positions -1 .. W) --------------------
    # h1 column j corresponds to sequence position j-1; tap k reads xp[:, j+k].
    # Zeroing the +/-1 taps on each sequence's boundary columns *is* the 'same' zero pad,
    # so sequences packed along the lane axis never leak into each other.
    col1 = jax.lax.broadcasted_iota(jnp.int32, (C, Wp), 1)
    t0 = jnp.where(col1 % L == 1, 0.0, xp[:, 0:Wp])          # left tap, first col of a seq
    t2 = jnp.where(col1 % L == 0, 0.0, xp[:, 2:Wp + 2])      # right tap, last col of a seq
    h1 = f32dot(w1[0], t0) + f32dot(w1[1], xp[:, 1:Wp + 1]) + f32dot(w1[2], t2) + b1
    h1 = jnp.maximum(h1, 0.0)                                # (H, W+2); cols 0 / W+1 unused

    # ---- conv2 (k=3, 'same') + ReLU, width W ------------------------------------------
    # Output column c == sequence position c; tap k reads h1[:, c+k].
    col2 = jax.lax.broadcasted_iota(jnp.int32, (H, W), 1)
    t0 = jnp.where(col2 % L == 0,     0.0, h1[:, 0:W])
    t2 = jnp.where(col2 % L == L - 1, 0.0, h1[:, 2:W + 2])
    h2 = f32dot(w2[0], t0) + f32dot(w2[1], h1[:, 1:W + 1]) + f32dot(w2[2], t2) + b2
    h2 = jnp.maximum(h2, 0.0)                                # (H, W)

    # ---- fc (1x1 conv == dense over channels), unmasked lane-dense store ---------------
    o_ref[...] = f32dot(wf, h2) + bf


def pack_cnn_params(w1, b1, w2, b2, wf, bf):
    """One-time packing (module init) of PyTorch Conv1d-layout params into a single slab.

    w1 (H, C_in, 3), w2 (H, H, 3), wf (H, H, 1), biases (H,)  ->  (H, 3*C_in + 4*H + 3) f32.
    """
    H = w1.shape[0]
    parts = ([w1[:, :, k] for k in range(3)]
             + [w2[:, :, k] for k in range(3)]
             + [wf[:, :, 0], b1.reshape(H, 1), b2.reshape(H, 1), bf.reshape(H, 1)])
    return jnp.concatenate([p.astype(jnp.float32) for p in parts], axis=1)


@jax.jit
def cnn_pallas(x, wb):
    """x: (B, L, C_in) or (L, C_in) float32; wb: packed params from pack_cnn_params().
       Returns (B, L, H) (or (L, H)), matching the PyTorch module's per-sequence output."""
    squeeze = x.ndim == 2
    if squeeze:
        x = x[None]
    B, L, C = x.shape
    H = wb.shape[0]
    W = B * L

    # Channel-major packed lane slab + 2-column global halo.  The halo values are never
    # consumed (every tap that could read them is masked or feeds an unused column); the
    # pad only exists so the in-kernel width-constant slices stay in bounds.
    xp = jnp.pad(jnp.transpose(x, (2, 0, 1)).reshape(C, W).astype(jnp.float32),
                 ((0, 0), (2, 2)))

    kernel = functools.partial(_cnn_kernel, seq_len=L, c_in=C, hidden=H)
    vmem = pl.BlockSpec(memory_space=pltpu.MemorySpace.VMEM)
    out = pl.pallas_call(
        kernel,
        out_shape=jax.ShapeDtypeStruct((H, W), jnp.float32),
        in_specs=[vmem, vmem],
        out_specs=vmem,
        # No grid at this size: the whole problem is a handful of vregs and per-step
        # overhead would dominate.  For large B add a leading "parallel" grid axis over
        # batch groups (dimension_semantics=("parallel",)), sized for v7x's 64 MiB VMEM.
    )(xp, wb.astype(jnp.float32))

    # (H, B*L) -> (B, L, H): tiny layout transpose that fuses with the consumer under jit.
    y = out.reshape(H, B, L).transpose(1, 2, 0)
    return y[0] if squeeze else y


def cnn_reference(x, w1, b1, w2, b2, wf, bf):
    """Pure-JAX per-sequence re-implementation of the PyTorch forward. x: (B, L, C) -> (B, L, H)."""
    def conv1d(inp, w, b, pad):
        out = jax.lax.conv_general_dilated(
            inp, w.astype(jnp.float32), window_strides=(1,),
            padding=[(pad, pad)], dimension_numbers=("NCH", "OIH", "NCH"))
        return out + b[None, :, None]

    xt = jnp.transpose(x, (0, 2, 1)).astype(jnp.float32)   # (B, C, L)
    h = jnp.maximum(conv1d(xt, w1, b1, 1), 0.0)
    h = jnp.maximum(conv1d(h, w2, b2, 1), 0.0)
    o = conv1d(h, wf, bf, 0)
    return jnp.transpose(o, (0, 2, 1))                      # (B, L, H)


if __name__ == "__main__":
    B = 8             # batch of sequences packed along the lane axis (B*L = 128 lanes)
    L = 16            # sequence length
    dna_channels = 4  # input channels
    hidden = 8        # hidden_size

    key = jax.random.PRNGKey(0)
    k_x, k_w1, k_b1, k_w2, k_b2, k_wf, k_bf = jax.random.split(key, 7)

    x = jax.random.normal(k_x, (B, L, dna_channels), dtype=jnp.float32)

    # Deterministic synthetic parameters (PyTorch Conv1d weight layouts).
    w1 = 0.1 * jax.random.normal(k_w1, (hidden, dna_channels, 3), dtype=jnp.float32)
    b1 = 0.1 * jax.random.normal(k_b1, (hidden,), dtype=jnp.float32)
    w2 = 0.1 * jax.random.normal(k_w2, (hidden, hidden, 3), dtype=jnp.float32)
    b2 = 0.1 * jax.random.normal(k_b2, (hidden,), dtype=jnp.float32)
    wf = 0.1 * jax.random.normal(k_wf, (hidden, hidden, 1), dtype=jnp.float32)
    bf = 0.1 * jax.random.normal(k_bf, (hidden,), dtype=jnp.float32)

    wb = pack_cnn_params(w1, b1, w2, b2, wf, bf)   # once, at "module init"

    out = jax.block_until_ready(cnn_pallas(x, wb))           # (B, L, hidden)
    ref = cnn_reference(x, w1, b1, w2, b2, wf, bf)
    assert out.shape == (B, L, hidden)
    assert jnp.allclose(out, ref, atol=1e-5, rtol=1e-5), "batched mismatch vs reference"

    # Single-sequence path, exactly matching the PyTorch module signature (L, C) -> (L, H).
    out1 = jax.block_until_ready(cnn_pallas(x[0], wb))
    assert out1.shape == (L, hidden)
    assert jnp.allclose(out1, ref[0], atol=1e-5, rtol=1e-5), "single-seq mismatch vs reference"

    print("KERNEL_OK")
</pallas_src>

<mosaic_0001>
module attributes {stable_mosaic.version = 11 : i64} {
  func.func @_cnn_kernel(%arg0: memref<4x132xf32, #tpu.memory_space<vmem>>, %arg1: memref<8x47xf32, #tpu.memory_space<vmem>>, %arg2: memref<8x128xf32, #tpu.memory_space<vmem>>) attributes {dimension_semantics = [], scalar_prefetch = 0 : i64, scratch_operands = 0 : i64, tpu.core_type = #tpu.core_type<tc>} {
    %c0 = arith.constant 0 : index
    %c0_0 = arith.constant 0 : index
    %0 = vector.load %arg0[%c0, %c0_0] : memref<4x132xf32, #tpu.memory_space<vmem>>, vector<4x132xf32>
    %c0_1 = arith.constant 0 : index
    %c0_2 = arith.constant 0 : index
    %1 = vector.load %arg1[%c0_1, %c0_2] : memref<8x47xf32, #tpu.memory_space<vmem>>, vector<8x47xf32>
    %2 = vector.extract_strided_slice %1 {offsets = [0, 0], sizes = [8, 4], strides = [1, 1]} : vector<8x47xf32> to vector<8x4xf32>
    %3 = vector.extract_strided_slice %1 {offsets = [0, 4], sizes = [8, 4], strides = [1, 1]} : vector<8x47xf32> to vector<8x4xf32>
    %4 = vector.extract_strided_slice %1 {offsets = [0, 8], sizes = [8, 4], strides = [1, 1]} : vector<8x47xf32> to vector<8x4xf32>
    %5 = vector.extract_strided_slice %1 {offsets = [0, 12], sizes = [8, 8], strides = [1, 1]} : vector<8x47xf32> to vector<8x8xf32>
    %6 = vector.extract_strided_slice %1 {offsets = [0, 20], sizes = [8, 8], strides = [1, 1]} : vector<8x47xf32> to vector<8x8xf32>
    %7 = vector.extract_strided_slice %1 {offsets = [0, 28], sizes = [8, 8], strides = [1, 1]} : vector<8x47xf32> to vector<8x8xf32>
    %8 = vector.extract_strided_slice %1 {offsets = [0, 36], sizes = [8, 8], strides = [1, 1]} : vector<8x47xf32> to vector<8x8xf32>
    %9 = vector.extract_strided_slice %1 {offsets = [0, 44], sizes = [8, 1], strides = [1, 1]} : vector<8x47xf32> to vector<8x1xf32>
    %10 = vector.extract_strided_slice %1 {offsets = [0, 45], sizes = [8, 1], strides = [1, 1]} : vector<8x47xf32> to vector<8x1xf32>
    %11 = vector.extract_strided_slice %1 {offsets = [0, 46], sizes = [8, 1], strides = [1, 1]} : vector<8x47xf32> to vector<8x1xf32>
    %12 = tpu.iota {dimensions = array<i32: 1>} : vector<4x130xi32>
    %c16_i32 = arith.constant 16 : i32
    %c0_i32 = arith.constant 0 : i32
    %13 = arith.cmpi eq, %c16_i32, %c0_i32 : i32
    %c1_i32 = arith.constant 1 : i32
    %14 = arith.select %13, %c1_i32, %c16_i32 : i32
    %15 = vector.broadcast %14 : i32 to vector<4x130xi32>
    %16 = arith.remsi %12, %15 : vector<4x130xi32>
    %c0_i32_3 = arith.constant 0 : i32
    %17 = vector.broadcast %c0_i32_3 : i32 to vector<4x130xi32>
    %18 = arith.cmpi ne, %16, %17 : vector<4x130xi32>
    %c0_i32_4 = arith.constant 0 : i32
    %19 = vector.broadcast %c0_i32_4 : i32 to vector<4x130xi32>
    %20 = arith.cmpi slt, %16, %19 : vector<4x130xi32>
    %c0_i32_5 = arith.constant 0 : i32
    %21 = arith.cmpi slt, %14, %c0_i32_5 : i32
    %22 = vector.broadcast %21 : i1 to vector<4x130xi1>
    %23 = vector.broadcast %22 : vector<4x130xi1> to vector<4x130xi1>
    %24 = arith.xori %20, %23 : vector<4x130xi1>
    %25 = arith.andi %24, %18 : vector<4x130xi1>
    %26 = vector.broadcast %14 : i32 to vector<4x130xi32>
    %27 = arith.addi %16, %26 : vector<4x130xi32>
    %28 = arith.select %25, %27, %16 : vector<4x130xi1>, vector<4x130xi32>
    %c1_i32_6 = arith.constant 1 : i32
    %29 = vector.broadcast %c1_i32_6 : i32 to vector<4x130xi32>
    %30 = arith.cmpi eq, %28, %29 : vector<4x130xi32>
    %31 = vector.extract_strided_slice %0 {offsets = [0, 0], sizes = [4, 130], strides = [1, 1]} : vector<4x132xf32> to vector<4x130xf32>
    %cst = arith.constant 0.000000e+00 : f32
    %32 = vector.broadcast %cst : f32 to vector<4x130xf32>
    %33 = arith.select %30, %32, %31 : vector<4x130xi1>, vector<4x130xf32>
    %c16_i32_7 = arith.constant 16 : i32
    %c0_i32_8 = arith.constant 0 : i32
    %34 = arith.cmpi eq, %c16_i32_7, %c0_i32_8 : i32
    %c1_i32_9 = arith.constant 1 : i32
    %35 = arith.select %34, %c1_i32_9, %c16_i32_7 : i32
    %36 = vector.broadcast %35 : i32 to vector<4x130xi32>
    %37 = arith.remsi %12, %36 : vector<4x130xi32>
    %c0_i32_10 = arith.constant 0 : i32
    %38 = vector.broadcast %c0_i32_10 : i32 to vector<4x130xi32>
    %39 = arith.cmpi ne, %37, %38 : vector<4x130xi32>
    %c0_i32_11 = arith.constant 0 : i32
    %40 = vector.broadcast %c0_i32_11 : i32 to vector<4x130xi32>
    %41 = arith.cmpi slt, %37, %40 : vector<4x130xi32>
    %c0_i32_12 = arith.constant 0 : i32
    %42 = arith.cmpi slt, %35, %c0_i32_12 : i32
    %43 = vector.broadcast %42 : i1 to vector<4x130xi1>
    %44 = vector.broadcast %43 : vector<4x130xi1> to vector<4x130xi1>
    %45 = arith.xori %41, %44 : vector<4x130xi1>
    %46 = arith.andi %45, %39 : vector<4x130xi1>
    %47 = vector.broadcast %35 : i32 to vector<4x130xi32>
    %48 = arith.addi %37, %47 : vector<4x130xi32>
    %49 = arith.select %46, %48, %37 : vector<4x130xi1>, vector<4x130xi32>
    %c0_i32_13 = arith.constant 0 : i32
    %50 = vector.broadcast %c0_i32_13 : i32 to vector<4x130xi32>
    %51 = arith.cmpi eq, %49, %50 : vector<4x130xi32>
    %52 = vector.extract_strided_slice %0 {offsets = [0, 2], sizes = [4, 130], strides = [1, 1]} : vector<4x132xf32> to vector<4x130xf32>
    %cst_14 = arith.constant 0.000000e+00 : f32
    %53 = vector.broadcast %cst_14 : f32 to vector<4x130xf32>
    %54 = arith.select %51, %53, %52 : vector<4x130xi1>, vector<4x130xf32>
    %cst_15 = arith.constant dense<0.000000e+00> : vector<8x130xf32>
    %55 = tpu.matmul %2, %33, %cst_15 {dimension_numbers = #tpu.dot_dimension_numbers<[1], [0], [0], [1], [0, 0, 1, 1], [], []>} : vector<8x4xf32>, vector<4x130xf32>, vector<8x130xf32> -> vector<8x130xf32>
    %56 = vector.extract_strided_slice %0 {offsets = [0, 1], sizes = [4, 130], strides = [1, 1]} : vector<4x132xf32> to vector<4x130xf32>
    %cst_16 = arith.constant dense<0.000000e+00> : vector<8x130xf32>
    %57 = tpu.matmul %3, %56, %cst_16 {dimension_numbers = #tpu.dot_dimension_numbers<[1], [0], [0], [1], [0, 0, 1, 1], [], []>} : vector<8x4xf32>, vector<4x130xf32>, vector<8x130xf32> -> vector<8x130xf32>
    %58 = arith.addf %55, %57 : vector<8x130xf32>
    %cst_17 = arith.constant dense<0.000000e+00> : vector<8x130xf32>
    %59 = tpu.matmul %4, %54, %cst_17 {dimension_numbers = #tpu.dot_dimension_numbers<[1], [0], [0], [1], [0, 0, 1, 1], [], []>} : vector<8x4xf32>, vector<4x130xf32>, vector<8x130xf32> -> vector<8x130xf32>
    %60 = arith.addf %58, %59 : vector<8x130xf32>
    %61 = vector.broadcast %9 : vector<8x1xf32> to vector<8x130xf32>
    %62 = arith.addf %60, %61 : vector<8x130xf32>
    %cst_18 = arith.constant 0.000000e+00 : f32
    %63 = vector.broadcast %cst_18 : f32 to vector<8x130xf32>
    %64 = arith.maximumf %62, %63 : vector<8x130xf32>
    %65 = tpu.iota {dimensions = array<i32: 1>} : vector<8x128xi32>
    %c16_i32_19 = arith.constant 16 : i32
    %c0_i32_20 = arith.constant 0 : i32
    %66 = arith.cmpi eq, %c16_i32_19, %c0_i32_20 : i32
    %c1_i32_21 = arith.constant 1 : i32
    %67 = arith.select %66, %c1_i32_21, %c16_i32_19 : i32
    %68 = vector.broadcast %67 : i32 to vector<8x128xi32>
    %69 = arith.remsi %65, %68 : vector<8x128xi32>
    %c0_i32_22 = arith.constant 0 : i32
    %70 = vector.broadcast %c0_i32_22 : i32 to vector<8x128xi32>
    %71 = arith.cmpi ne, %69, %70 : vector<8x128xi32>
    %c0_i32_23 = arith.constant 0 : i32
    %72 = vector.broadcast %c0_i32_23 : i32 to vector<8x128xi32>
    %73 = arith.cmpi slt, %69, %72 : vector<8x128xi32>
    %c0_i32_24 = arith.constant 0 : i32
    %74 = arith.cmpi slt, %67, %c0_i32_24 : i32
    %75 = vector.broadcast %74 : i1 to vector<8x128xi1>
    %76 = vector.broadcast %75 : vector<8x128xi1> to vector<8x128xi1>
    %77 = arith.xori %73, %76 : vector<8x128xi1>
    %78 = arith.andi %77, %71 : vector<8x128xi1>
    %79 = vector.broadcast %67 : i32 to vector<8x128xi32>
    %80 = arith.addi %69, %79 : vector<8x128xi32>
    %81 = arith.select %78, %80, %69 : vector<8x128xi1>, vector<8x128xi32>
    %c0_i32_25 = arith.constant 0 : i32
    %82 = vector.broadcast %c0_i32_25 : i32 to vector<8x128xi32>
    %83 = arith.cmpi eq, %81, %82 : vector<8x128xi32>
    %84 = vector.extract_strided_slice %64 {offsets = [0, 0], sizes = [8, 128], strides = [1, 1]} : vector<8x130xf32> to vector<8x128xf32>
    %cst_26 = arith.constant 0.000000e+00 : f32
    %85 = vector.broadcast %cst_26 : f32 to vector<8x128xf32>
    %86 = arith.select %83, %85, %84 : vector<8x128xi1>, vector<8x128xf32>
    %c16_i32_27 = arith.constant 16 : i32
    %c0_i32_28 = arith.constant 0 : i32
    %87 = arith.cmpi eq, %c16_i32_27, %c0_i32_28 : i32
    %c1_i32_29 = arith.constant 1 : i32
    %88 = arith.select %87, %c1_i32_29, %c16_i32_27 : i32
    %89 = vector.broadcast %88 : i32 to vector<8x128xi32>
    %90 = arith.remsi %65, %89 : vector<8x128xi32>
    %c0_i32_30 = arith.constant 0 : i32
    %91 = vector.broadcast %c0_i32_30 : i32 to vector<8x128xi32>
    %92 = arith.cmpi ne, %90, %91 : vector<8x128xi32>
    %c0_i32_31 = arith.constant 0 : i32
    %93 = vector.broadcast %c0_i32_31 : i32 to vector<8x128xi32>
    %94 = arith.cmpi slt, %90, %93 : vector<8x128xi32>
    %c0_i32_32 = arith.constant 0 : i32
    %95 = arith.cmpi slt, %88, %c0_i32_32 : i32
    %96 = vector.broadcast %95 : i1 to vector<8x128xi1>
    %97 = vector.broadcast %96 : vector<8x128xi1> to vector<8x128xi1>
    %98 = arith.xori %94, %97 : vector<8x128xi1>
    %99 = arith.andi %98, %92 : vector<8x128xi1>
    %100 = vector.broadcast %88 : i32 to vector<8x128xi32>
    %101 = arith.addi %90, %100 : vector<8x128xi32>
    %102 = arith.select %99, %101, %90 : vector<8x128xi1>, vector<8x128xi32>
    %c15_i32 = arith.constant 15 : i32
    %103 = vector.broadcast %c15_i32 : i32 to vector<8x128xi32>
    %104 = arith.cmpi eq, %102, %103 : vector<8x128xi32>
    %105 = vector.extract_strided_slice %64 {offsets = [0, 2], sizes = [8, 128], strides = [1, 1]} : vector<8x130xf32> to vector<8x128xf32>
    %cst_33 = arith.constant 0.000000e+00 : f32
    %106 = vector.broadcast %cst_33 : f32 to vector<8x128xf32>
    %107 = arith.select %104, %106, %105 : vector<8x128xi1>, vector<8x128xf32>
    %cst_34 = arith.constant dense<0.000000e+00> : vector<8x128xf32>
    %108 = tpu.matmul %5, %86, %cst_34 {dimension_numbers = #tpu.dot_dimension_numbers<[1], [0], [0], [1], [0, 0, 1, 1], [], []>} : vector<8x8xf32>, vector<8x128xf32>, vector<8x128xf32> -> vector<8x128xf32>
    %109 = vector.extract_strided_slice %64 {offsets = [0, 1], sizes = [8, 128], strides = [1, 1]} : vector<8x130xf32> to vector<8x128xf32>
    %cst_35 = arith.constant dense<0.000000e+00> : vector<8x128xf32>
    %110 = tpu.matmul %6, %109, %cst_35 {dimension_numbers = #tpu.dot_dimension_numbers<[1], [0], [0], [1], [0, 0, 1, 1], [], []>} : vector<8x8xf32>, vector<8x128xf32>, vector<8x128xf32> -> vector<8x128xf32>
    %111 = arith.addf %108, %110 : vector<8x128xf32>
    %cst_36 = arith.constant dense<0.000000e+00> : vector<8x128xf32>
    %112 = tpu.matmul %7, %107, %cst_36 {dimension_numbers = #tpu.dot_dimension_numbers<[1], [0], [0], [1], [0, 0, 1, 1], [], []>} : vector<8x8xf32>, vector<8x128xf32>, vector<8x128xf32> -> vector<8x128xf32>
    %113 = arith.addf %111, %112 : vector<8x128xf32>
    %114 = vector.broadcast %10 : vector<8x1xf32> to vector<8x128xf32>
    %115 = arith.addf %113, %114 : vector<8x128xf32>
    %cst_37 = arith.constant 0.000000e+00 : f32
    %116 = vector.broadcast %cst_37 : f32 to vector<8x128xf32>
    %117 = arith.maximumf %115, %116 : vector<8x128xf32>
    %cst_38 = arith.constant dense<0.000000e+00> : vector<8x128xf32>
    %118 = tpu.matmul %8, %117, %cst_38 {dimension_numbers = #tpu.dot_dimension_numbers<[1], [0], [0], [1], [0, 0, 1, 1], [], []>} : vector<8x8xf32>, vector<8x128xf32>, vector<8x128xf32> -> vector<8x128xf32>
    %119 = vector.broadcast %11 : vector<8x1xf32> to vector<8x128xf32>
    %120 = arith.addf %118, %119 : vector<8x128xf32>
    %c0_39 = arith.constant 0 : index
    %c0_40 = arith.constant 0 : index
    %121 = vector.load %arg2[%c0_39, %c0_40] : memref<8x128xf32, #tpu.memory_space<vmem>>, vector<8x128xf32>
    tpu.vector_store %arg2[%c0_39, %c0_40], %120 {strides = array<i32>} : memref<8x128xf32, #tpu.memory_space<vmem>>, vector<8x128xf32>,
    return
  }
}

</mosaic_0001>

<llo_original>
// kernel: cnn_pallas.1
$region0: #{cnn_pallas.1}
  #allocation0 [shape = 'u32[]', space=smem, size = 0x4, offset = 0x4, fixed_abs, tag = 'smem constant byte address 0x4 - core index']
  #allocation1 [shape = 'u32[144,128]{1,0:T(1,128)}', space=vmem, size = 0x12000, scoped, tag = 'internal scratch']
  %s0 = inlined_call_operand.vmem [shape: f32[4,132], index: 0, kind: input, shape index: {}]
  %s1 = inlined_call_operand.vmem [shape: f32[8,47], index: 1, kind: input, shape index: {}]
  %s2 = inlined_call_operand.vmem [shape: f32[8,128], index: 2, kind: output, shape index: {}]
  %s3 = sld [smem:[#allocation0]]
  $region18: #{cnn_pallas.1} parent=0
    _
  %s5 = ssub.s32 1, %s3
  %s6 = scalar_select 0, %s5, %s3
  // Predicated region
  $region2: #{cnn_pallas.1} parent=0 // pred_check
    _
  $region3: #{cnn_pallas.1} parent=0 // pred_check_branch
    %8 = sbr.rel (0) target = $region5
  $region4: #{cnn_pallas.1} parent=0 // pred_region
    _
  $region5: #{cnn_pallas.1} parent=0 // pred_fallthru
    _
  // Predicated region
  $region6: #{cnn_pallas.1} parent=0 // pred_check
    _
  $region7: #{cnn_pallas.1} parent=0 // pred_check_branch
    %10 = sbr.rel (0) target = $region9
  $region8: #{cnn_pallas.1} parent=0 // pred_region
    _
  $region9: #{cnn_pallas.1} parent=0 // pred_fallthru
    _
  %v11 = vld [vmem:[%s0] sm:$0xff]
  %v12 = vld [vmem:[%s1] sm:$0xff]
  %v13 = vlaneseq
  %v14 = vand.u32 %v13, 127
  %v15 = vadd.s32 %v14, 128
  %vm16 = vcmp.lt.s32.totalorder %v14, 0
  %v17 = vsub.s32 0, %v14
  %v18 = vsel %vm16, %v17, %v14
  %v19 = vshrl.u32 %v18, 4
  %v20 = vand.u32 %v18, 15
  %v21 = vsub.s32 0, %v20
  %v22 = vsel %vm16, %v21, %v20
  %vm23 = vcmp.lt.s32.totalorder %v15, 0
  %v24 = vsub.s32 0, %v15
  %v25 = vsel %vm23, %v24, %v15
  %v26 = vshrl.u32 %v25, 4
  %v27 = vand.u32 %v25, 15
  %v28 = vsub.s32 0, %v27
  %v29 = vsel %vm23, %v28, %v27
  %vm30 = vcmp.ne.s32.totalorder %v22, 0
  %vm31 = vcmp.ne.s32.totalorder %v29, 0
  %vm32 = vcmp.lt.s32.totalorder %v22, 0
  %vm33 = vcmp.lt.s32.totalorder %v29, 0
  %vm34 = vmand %vm32, %vm30
  %vm35 = vmand %vm33, %vm31
  %v36 = vadd.s32 %v22, 16
  %v37 = vadd.s32 %v29, 16
  %v38 = vsel %vm34, %v36, %v22
  %v39 = vsel %vm35, %v37, %v29
  %vm40 = vcmp.eq.s32.totalorder %v38, 1
  %vm41 = vcmp.eq.s32.totalorder %v39, 1
  %v43 = vcombine.high %v11, %v11
  %v45 = vsel %vm40, 0.0, %v11
  %v46 = vsel %vm41, 0.0, %v43
  %vm47 = vcmp.eq.s32.totalorder %v38, 0
  %vm48 = vcmp.eq.s32.totalorder %v39, 0
  %49 = vrot.lane.b32.xlu0 %v11, 126
  %v50 = vpop.permute.xlu0 %49
  %51 = vrot.lane.b32.xlu0 %v43, 126
  %v52 = vpop.permute.xlu0 %51
  %vm53 = vcmask 1031168
  %v54 = vsel %vm53, %v50, %v52
  %v57 = vsel %vm47, 0.0, %v54
  %v58 = vsel %vm48, 0.0, %v52
  %60 = vrot.lane.b32.xlu0 %v12, 124
  %v61 = vpop.permute.xlu0 %60
  %62 = vrot.lane.b32.xlu0 %v11, 127
  %v63 = vpop.permute.xlu0 %62
  %64 = vrot.lane.b32.xlu0 %v43, 127
  %v65 = vpop.permute.xlu0 %64
  %vm66 = vcmask 1039360
  %v67 = vsel %vm66, %v63, %v65
  %vm68 = vcmask 31744
  %v69 = vsel %vm68, %v61, 0
  %vm71 = vcmask 1043456
  %v72 = vsel %vm71, %v67, 0
  %v74 = vsel %vm71, %v65, 0
  %76 = vmatprep.subr.mxu0 %v74
  %77 = vmatpush1.msra.mxu0 %v72
  %78 = vmatprep.subr.mxu0 0.0
  %79 = vmatpush1.msra.mxu0 0.0
  %80 = vmatprep.subr.mxu0 0.0
  %81 = vmatpush1.msra.mxu0 0.0
  %82 = vmatprep.subr.mxu0 0.0
  %83 = vmatpush1.msra.mxu0 0.0
  %84 = vmatprep.subr.mxu0 0.0
  %85 = vmatpush1.msra.mxu0 0.0
  %86 = vmatprep.subr.mxu0 0.0
  %87 = vmatpush1.msra.mxu0 0.0
  %88 = vmatprep.subr.mxu0 0.0
  %89 = vmatpush1.msra.mxu0 0.0
  %90 = vmatprep.subr.mxu0 0.0
  %91 = vmatpush1.msra.mxu0 0.0
  %92 = vmatprep.subr.mxu0 0.0
  %93 = vmatpush1.msra.mxu0 0.0
  %94 = vmatprep.subr.mxu0 0.0
  %95 = vmatpush1.msra.mxu0 0.0
  %96 = vmatprep.subr.mxu0 0.0
  %97 = vmatpush1.msra.mxu0 0.0
  %98 = vmatprep.subr.mxu0 0.0
  %99 = vmatpush1.msra.mxu0 0.0
  %100 = vmatprep.subr.mxu0 0.0
  %101 = vmatpush1.msra.mxu0 0.0
  %102 = vmatprep.subr.mxu0 0.0
  %103 = vmatpush1.msra.mxu0 0.0
  %104 = vmatprep.subr.mxu0 0.0
  %105 = vmatpush1.msra.mxu0 0.0
  %106 = vmatprep.subr.mxu0 0.0
  %107 = vmatpush1.msra.mxu0 0.0
  %108 = vmatprep.subr.mxu0 0.0
  %109 = vmatpush1.msra.mxu0 0.0
  %110 = vmatprep.subr.mxu0 0.0
  %111 = vmatpush1.msra.mxu0 0.0
  %112 = vmatprep.subr.mxu0 0.0
  %113 = vmatpush1.msra.mxu0 0.0
  %114 = vmatprep.subr.mxu0 0.0
  %115 = vmatpush1.msra.mxu0 0.0
  %116 = vmatprep.subr.mxu0 0.0
  %117 = vmatpush1.msra.mxu0 0.0
  %118 = vmatprep.subr.mxu0 0.0
  %119 = vmatpush1.msra.mxu0 0.0
  %120 = vmatprep.subr.mxu0 0.0
  %121 = vmatpush1.msra.mxu0 0.0
  %122 = vmatprep.subr.mxu0 0.0
  %123 = vmatpush1.msra.mxu0 0.0
  %124 = vmatprep.subr.mxu0 0.0
  %125 = vmatpush1.msra.mxu0 0.0
  %126 = vmatprep.subr.mxu0 0.0
  %127 = vmatpush1.msra.mxu0 0.0
  %128 = vmatprep.subr.mxu0 0.0
  %129 = vmatpush1.msra.mxu0 0.0
  %130 = vmatprep.subr.mxu0 0.0
  %131 = vmatpush1.msra.mxu0 0.0
  %132 = vmatprep.subr.mxu0 0.0
  %133 = vmatpush1.msra.mxu0 0.0
  %134 = vmatprep.subr.mxu0 0.0
  %135 = vmatpush1.msra.mxu0 0.0
  %136 = vmatprep.subr.mxu0 0.0
  %137 = vmatpush1.msra.mxu0 0.0
  %138 = vmatprep.subr.mxu0 0.0
  %139 = vmatpush1.msra.mxu0 0.0
  %140 = vmatprep.mubr.f32.mxu0 0.0
  %141 = vmatmul.mubr.f32.gmra.mrb[0].mxu0 %v69
  %v142 = vpop.f32.mrb[0].mxu0
  %v143 = vadd.f32 0.0, %v142
  %v144 = vpop.f32.mrb[0].mxu0
  %v145 = vadd.f32 0.0, %v144
  %146 = vdwg.mxu0
  %v147 = vsel %vm68, %v12, 0
  %v150 = vsel %vm71, %v45, 0
  %v153 = vsel %vm71, %v46, 0
  %155 = vmatprep.subr.mxu0 %v153
  %156 = vmatpush1.msra.mxu0 %v150
  %157 = vmatprep.subr.mxu0 0.0
  %158 = vmatpush1.msra.mxu0 0.0
  %159 = vmatprep.subr.mxu0 0.0
  %160 = vmatpush1.msra.mxu0 0.0
  %161 = vmatprep.subr.mxu0 0.0
  %162 = vmatpush1.msra.mxu0 0.0
  %163 = vmatprep.subr.mxu0 0.0
  %164 = vmatpush1.msra.mxu0 0.0
  %165 = vmatprep.subr.mxu0 0.0
  %166 = vmatpush1.msra.mxu0 0.0
  %167 = vmatprep.subr.mxu0 0.0
  %168 = vmatpush1.msra.mxu0 0.0
  %169 = vmatprep.subr.mxu0 0.0
  %170 = vmatpush1.msra.mxu0 0.0
  %171 = vmatprep.subr.mxu0 0.0
  %172 = vmatpush1.msra.mxu0 0.0
  %173 = vmatprep.subr.mxu0 0.0
  %174 = vmatpush1.msra.mxu0 0.0
  %175 = vmatprep.subr.mxu0 0.0
  %176 = vmatpush1.msra.mxu0 0.0
  %177 = vmatprep.subr.mxu0 0.0
  %178 = vmatpush1.msra.mxu0 0.0
  %179 = vmatprep.subr.mxu0 0.0
  %180 = vmatpush1.msra.mxu0 0.0
  %181 = vmatprep.subr.mxu0 0.0
  %182 = vmatpush1.msra.mxu0 0.0
  %183 = vmatprep.subr.mxu0 0.0
  %184 = vmatpush1.msra.mxu0 0.0
  %185 = vmatprep.subr.mxu0 0.0
  %186 = vmatpush1.msra.mxu0 0.0
  %187 = vmatprep.subr.mxu0 0.0
  %188 = vmatpush1.msra.mxu0 0.0
  %189 = vmatprep.subr.mxu0 0.0
  %190 = vmatpush1.msra.mxu0 0.0
  %191 = vmatprep.subr.mxu0 0.0
  %192 = vmatpush1.msra.mxu0 0.0
  %193 = vmatprep.subr.mxu0 0.0
  %194 = vmatpush1.msra.mxu0 0.0
  %195 = vmatprep.subr.mxu0 0.0
  %196 = vmatpush1.msra.mxu0 0.0
  %197 = vmatprep.subr.mxu0 0.0
  %198 = vmatpush1.msra.mxu0 0.0
  %199 = vmatprep.subr.mxu0 0.0
  %200 = vmatpush1.msra.mxu0 0.0
  %201 = vmatprep.subr.mxu0 0.0
  %202 = vmatpush1.msra.mxu0 0.0
  %203 = vmatprep.subr.mxu0 0.0
  %204 = vmatpush1.msra.mxu0 0.0
  %205 = vmatprep.subr.mxu0 0.0
  %206 = vmatpush1.msra.mxu0 0.0
  %207 = vmatprep.subr.mxu0 0.0
  %208 = vmatpush1.msra.mxu0 0.0
  %209 = vmatprep.subr.mxu0 0.0
  %210 = vmatpush1.msra.mxu0 0.0
  %211 = vmatprep.subr.mxu0 0.0
  %212 = vmatpush1.msra.mxu0 0.0
  %213 = vmatprep.subr.mxu0 0.0
  %214 = vmatpush1.msra.mxu0 0.0
  %215 = vmatprep.subr.mxu0 0.0
  %216 = vmatpush1.msra.mxu0 0.0
  %217 = vmatprep.subr.mxu0 0.0
  %218 = vmatpush1.msra.mxu0 0.0
  %219 = vmatprep.mubr.f32.mxu0 0.0
  %220 = vmatmul.mubr.f32.gmra.mrb[0].mxu0 %v147
  %v221 = vpop.f32.mrb[0].mxu0
  %v222 = vadd.f32 %v143, %v221
  %v223 = vpop.f32.mrb[0].mxu0
  %v224 = vadd.f32 %v145, %v223
  %225 = vdwg.mxu0
  %226 = vrot.lane.b32.xlu0 %v12, 120
  %v227 = vpop.permute.xlu0 %226
  %v228 = vsel %vm68, %v227, 0
  %v231 = vsel %vm71, %v57, 0
  %v234 = vsel %vm71, %v58, 0
  %236 = vmatprep.subr.mxu0 %v234
  %237 = vmatpush1.msra.mxu0 %v231
  %238 = vmatprep.subr.mxu0 0.0
  %239 = vmatpush1.msra.mxu0 0.0
  %240 = vmatprep.subr.mxu0 0.0
  %241 = vmatpush1.msra.mxu0 0.0
  %242 = vmatprep.subr.mxu0 0.0
  %243 = vmatpush1.msra.mxu0 0.0
  %244 = vmatprep.subr.mxu0 0.0
  %245 = vmatpush1.msra.mxu0 0.0
  %246 = vmatprep.subr.mxu0 0.0
  %247 = vmatpush1.msra.mxu0 0.0
  %248 = vmatprep.subr.mxu0 0.0
  %249 = vmatpush1.msra.mxu0 0.0
  %250 = vmatprep.subr.mxu0 0.0
  %251 = vmatpush1.msra.mxu0 0.0
  %252 = vmatprep.subr.mxu0 0.0
  %253 = vmatpush1.msra.mxu0 0.0
  %254 = vmatprep.subr.mxu0 0.0
  %255 = vmatpush1.msra.mxu0 0.0
  %256 = vmatprep.subr.mxu0 0.0
  %257 = vmatpush1.msra.mxu0 0.0
  %258 = vmatprep.subr.mxu0 0.0
  %259 = vmatpush1.msra.mxu0 0.0
  %260 = vmatprep.subr.mxu0 0.0
  %261 = vmatpush1.msra.mxu0 0.0
  %262 = vmatprep.subr.mxu0 0.0
  %263 = vmatpush1.msra.mxu0 0.0
  %264 = vmatprep.subr.mxu0 0.0
  %265 = vmatpush1.msra.mxu0 0.0
  %266 = vmatprep.subr.mxu0 0.0
  %267 = vmatpush1.msra.mxu0 0.0
  %268 = vmatprep.subr.mxu0 0.0
  %269 = vmatpush1.msra.mxu0 0.0
  %270 = vmatprep.subr.mxu0 0.0
  %271 = vmatpush1.msra.mxu0 0.0
  %272 = vmatprep.subr.mxu0 0.0
  %273 = vmatpush1.msra.mxu0 0.0
  %274 = vmatprep.subr.mxu0 0.0
  %275 = vmatpush1.msra.mxu0 0.0
  %276 = vmatprep.subr.mxu0 0.0
  %277 = vmatpush1.msra.mxu0 0.0
  %278 = vmatprep.subr.mxu0 0.0
  %279 = vmatpush1.msra.mxu0 0.0
  %280 = vmatprep.subr.mxu0 0.0
  %281 = vmatpush1.msra.mxu0 0.0
  %282 = vmatprep.subr.mxu0 0.0
  %283 = vmatpush1.msra.mxu0 0.0
  %284 = vmatprep.subr.mxu0 0.0
  %285 = vmatpush1.msra.mxu0 0.0
  %286 = vmatprep.subr.mxu0 0.0
  %287 = vmatpush1.msra.mxu0 0.0
  %288 = vmatprep.subr.mxu0 0.0
  %289 = vmatpush1.msra.mxu0 0.0
  %290 = vmatprep.subr.mxu0 0.0
  %291 = vmatpush1.msra.mxu0 0.0
  %292 = vmatprep.subr.mxu0 0.0
  %293 = vmatpush1.msra.mxu0 0.0
  %294 = vmatprep.subr.mxu0 0.0
  %295 = vmatpush1.msra.mxu0 0.0
  %296 = vmatprep.subr.mxu0 0.0
  %297 = vmatpush1.msra.mxu0 0.0
  %298 = vmatprep.subr.mxu0 0.0
  %299 = vmatpush1.msra.mxu0 0.0
  %300 = vmatprep.mubr.f32.mxu0 0.0
  %301 = vmatmul.mubr.f32.gmra.mrb[0].mxu0 %v228
  %v302 = vpop.f32.mrb[0].mxu0
  %v303 = vadd.f32 0.0, %v302
  %v304 = vpop.f32.mrb[0].mxu0
  %v305 = vadd.f32 0.0, %v304
  %306 = vdwg.mxu0
  %v307 = vadd.f32 %v222, %v303
  %v308 = vadd.f32 %v224, %v305
  %309 = vset.pattern.permute.xlu0 44
  %310 = vperm.xlu0 %309, %v12
  %v311 = vpop.permute.xlu0 %310
  %v313 = vadd.f32 %v307, %v311
  %v314 = vadd.f32 %v308, %v311
  %v315 = vmax.f32 %v313, 0.0
  %v316 = vmax.f32 %v314, 0.0
  %v317 = vsel %vm47, 0.0, %v315
  %vm318 = vcmp.eq.s32.totalorder %v38, 15
  %321 = vrot.lane.b32.xlu0 %v315, 126
  %v322 = vpop.permute.xlu0 %321
  %323 = vrot.lane.b32.xlu0 %v316, 126
  %v324 = vpop.permute.xlu0 %323
  %v325 = vsel %vm53, %v322, %v324
  %v327 = vsel %vm318, 0.0, %v325
  %328 = vrot.lane.b32.xlu0 %v12, 108
  %v329 = vpop.permute.xlu0 %328
  %330 = vrot.lane.b32.xlu0 %v315, 127
  %v331 = vpop.permute.xlu0 %330
  %332 = vrot.lane.b32.xlu0 %v316, 127
  %v333 = vpop.permute.xlu0 %332
  %v334 = vsel %vm66, %v331, %v333
  %vm336 = vcmask 64512
  %v337 = vsel %vm336, %v329, 0
  %339 = vmatprep.subr.mxu0 0.0
  %340 = vmatpush1.msra.mxu0 %v334
  %341 = vmatprep.subr.mxu0 0.0
  %342 = vmatpush1.msra.mxu0 0.0
  %343 = vmatprep.subr.mxu0 0.0
  %344 = vmatpush1.msra.mxu0 0.0
  %345 = vmatprep.subr.mxu0 0.0
  %346 = vmatpush1.msra.mxu0 0.0
  %347 = vmatprep.subr.mxu0 0.0
  %348 = vmatpush1.msra.mxu0 0.0
  %349 = vmatprep.subr.mxu0 0.0
  %350 = vmatpush1.msra.mxu0 0.0
  %351 = vmatprep.subr.mxu0 0.0
  %352 = vmatpush1.msra.mxu0 0.0
  %353 = vmatprep.subr.mxu0 0.0
  %354 = vmatpush1.msra.mxu0 0.0
  %355 = vmatprep.subr.mxu0 0.0
  %356 = vmatpush1.msra.mxu0 0.0
  %357 = vmatprep.subr.mxu0 0.0
  %358 = vmatpush1.msra.mxu0 0.0
  %359 = vmatprep.subr.mxu0 0.0
  %360 = vmatpush1.msra.mxu0 0.0
  %361 = vmatprep.subr.mxu0 0.0
  %362 = vmatpush1.msra.mxu0 0.0
  %363 = vmatprep.subr.mxu0 0.0
  %364 = vmatpush1.msra.mxu0 0.0
  %365 = vmatprep.subr.mxu0 0.0
  %366 = vmatpush1.msra.mxu0 0.0
  %367 = vmatprep.subr.mxu0 0.0
  %368 = vmatpush1.msra.mxu0 0.0
  %369 = vmatprep.subr.mxu0 0.0
  %370 = vmatpush1.msra.mxu0 0.0
  %371 = vmatprep.subr.mxu0 0.0
  %372 = vmatpush1.msra.mxu0 0.0
  %373 = vmatprep.subr.mxu0 0.0
  %374 = vmatpush1.msra.mxu0 0.0
  %375 = vmatprep.subr.mxu0 0.0
  %376 = vmatpush1.msra.mxu0 0.0
  %377 = vmatprep.subr.mxu0 0.0
  %378 = vmatpush1.msra.mxu0 0.0
  %379 = vmatprep.subr.mxu0 0.0
  %380 = vmatpush1.msra.mxu0 0.0
  %381 = vmatprep.subr.mxu0 0.0
  %382 = vmatpush1.msra.mxu0 0.0
  %383 = vmatprep.subr.mxu0 0.0
  %384 = vmatpush1.msra.mxu0 0.0
  %385 = vmatprep.subr.mxu0 0.0
  %386 = vmatpush1.msra.mxu0 0.0
  %387 = vmatprep.subr.mxu0 0.0
  %388 = vmatpush1.msra.mxu0 0.0
  %389 = vmatprep.subr.mxu0 0.0
  %390 = vmatpush1.msra.mxu0 0.0
  %391 = vmatprep.subr.mxu0 0.0
  %392 = vmatpush1.msra.mxu0 0.0
  %393 = vmatprep.subr.mxu0 0.0
  %394 = vmatpush1.msra.mxu0 0.0
  %395 = vmatprep.subr.mxu0 0.0
  %396 = vmatpush1.msra.mxu0 0.0
  %397 = vmatprep.subr.mxu0 0.0
  %398 = vmatpush1.msra.mxu0 0.0
  %399 = vmatprep.subr.mxu0 0.0
  %400 = vmatpush1.msra.mxu0 0.0
  %401 = vmatprep.subr.mxu0 0.0
  %402 = vmatpush1.msra.mxu0 0.0
  %403 = vmatprep.mubr.f32.mxu0 0.0
  %404 = vmatmul.mubr.f32.gmra.mrb[0].mxu0 %v337
  %v405 = vpop.f32.mrb[0].mxu0
  %v406 = vadd.f32 0.0, %v405
  %v407 = vpop.f32.mrb[0].mxu0
  %408 = vdwg.mxu0
  %409 = vrot.lane.b32.xlu0 %v12, 116
  %v410 = vpop.permute.xlu0 %409
  %v411 = vsel %vm336, %v410, 0
  %413 = vmatprep.subr.mxu0 0.0
  %414 = vmatpush1.msra.mxu0 %v317
  %415 = vmatprep.subr.mxu0 0.0
  %416 = vmatpush1.msra.mxu0 0.0
  %417 = vmatprep.subr.mxu0 0.0
  %418 = vmatpush1.msra.mxu0 0.0
  %419 = vmatprep.subr.mxu0 0.0
  %420 = vmatpush1.msra.mxu0 0.0
  %421 = vmatprep.subr.mxu0 0.0
  %422 = vmatpush1.msra.mxu0 0.0
  %423 = vmatprep.subr.mxu0 0.0
  %424 = vmatpush1.msra.mxu0 0.0
  %425 = vmatprep.subr.mxu0 0.0
  %426 = vmatpush1.msra.mxu0 0.0
  %427 = vmatprep.subr.mxu0 0.0
  %428 = vmatpush1.msra.mxu0 0.0
  %429 = vmatprep.subr.mxu0 0.0
  %430 = vmatpush1.msra.mxu0 0.0
  %431 = vmatprep.subr.mxu0 0.0
  %432 = vmatpush1.msra.mxu0 0.0
  %433 = vmatprep.subr.mxu0 0.0
  %434 = vmatpush1.msra.mxu0 0.0
  %435 = vmatprep.subr.mxu0 0.0
  %436 = vmatpush1.msra.mxu0 0.0
  %437 = vmatprep.subr.mxu0 0.0
  %438 = vmatpush1.msra.mxu0 0.0
  %439 = vmatprep.subr.mxu0 0.0
  %440 = vmatpush1.msra.mxu0 0.0
  %441 = vmatprep.subr.mxu0 0.0
  %442 = vmatpush1.msra.mxu0 0.0
  %443 = vmatprep.subr.mxu0 0.0
  %444 = vmatpush1.msra.mxu0 0.0
  %445 = vmatprep.subr.mxu0 0.0
  %446 = vmatpush1.msra.mxu0 0.0
  %447 = vmatprep.subr.mxu0 0.0
  %448 = vmatpush1.msra.mxu0 0.0
  %449 = vmatprep.subr.mxu0 0.0
  %450 = vmatpush1.msra.mxu0 0.0
  %451 = vmatprep.subr.mxu0 0.0
  %452 = vmatpush1.msra.mxu0 0.0
  %453 = vmatprep.subr.mxu0 0.0
  %454 = vmatpush1.msra.mxu0 0.0
  %455 = vmatprep.subr.mxu0 0.0
  %456 = vmatpush1.msra.mxu0 0.0
  %457 = vmatprep.subr.mxu0 0.0
  %458 = vmatpush1.msra.mxu0 0.0
  %459 = vmatprep.subr.mxu0 0.0
  %460 = vmatpush1.msra.mxu0 0.0
  %461 = vmatprep.subr.mxu0 0.0
  %462 = vmatpush1.msra.mxu0 0.0
  %463 = vmatprep.subr.mxu0 0.0
  %464 = vmatpush1.msra.mxu0 0.0
  %465 = vmatprep.subr.mxu0 0.0
  %466 = vmatpush1.msra.mxu0 0.0
  %467 = vmatprep.subr.mxu0 0.0
  %468 = vmatpush1.msra.mxu0 0.0
  %469 = vmatprep.subr.mxu0 0.0
  %470 = vmatpush1.msra.mxu0 0.0
  %471 = vmatprep.subr.mxu0 0.0
  %472 = vmatpush1.msra.mxu0 0.0
  %473 = vmatprep.subr.mxu0 0.0
  %474 = vmatpush1.msra.mxu0 0.0
  %475 = vmatprep.subr.mxu0 0.0
  %476 = vmatpush1.msra.mxu0 0.0
  %477 = vmatprep.mubr.f32.mxu0 0.0
  %478 = vmatmul.mubr.f32.gmra.mrb[0].mxu0 %v411
  %v479 = vpop.f32.mrb[0].mxu0
  %v480 = vadd.f32 %v406, %v479
  %v481 = vpop.f32.mrb[0].mxu0
  %482 = vdwg.mxu0
  %483 = vrot.lane.b32.xlu0 %v12, 100
  %v484 = vpop.permute.xlu0 %483
  %v485 = vsel %vm336, %v484, 0
  %487 = vmatprep.subr.mxu0 0.0
  %488 = vmatpush1.msra.mxu0 %v327
  %489 = vmatprep.subr.mxu0 0.0
  %490 = vmatpush1.msra.mxu0 0.0
  %491 = vmatprep.subr.mxu0 0.0
  %492 = vmatpush1.msra.mxu0 0.0
  %493 = vmatprep.subr.mxu0 0.0
  %494 = vmatpush1.msra.mxu0 0.0
  %495 = vmatprep.subr.mxu0 0.0
  %496 = vmatpush1.msra.mxu0 0.0
  %497 = vmatprep.subr.mxu0 0.0
  %498 = vmatpush1.msra.mxu0 0.0
  %499 = vmatprep.subr.mxu0 0.0
  %500 = vmatpush1.msra.mxu0 0.0
  %501 = vmatprep.subr.mxu0 0.0
  %502 = vmatpush1.msra.mxu0 0.0
  %503 = vmatprep.subr.mxu0 0.0
  %504 = vmatpush1.msra.mxu0 0.0
  %505 = vmatprep.subr.mxu0 0.0
  %506 = vmatpush1.msra.mxu0 0.0
  %507 = vmatprep.subr.mxu0 0.0
  %508 = vmatpush1.msra.mxu0 0.0
  %509 = vmatprep.subr.mxu0 0.0
  %510 = vmatpush1.msra.mxu0 0.0
  %511 = vmatprep.subr.mxu0 0.0
  %512 = vmatpush1.msra.mxu0 0.0
  %513 = vmatprep.subr.mxu0 0.0
  %514 = vmatpush1.msra.mxu0 0.0
  %515 = vmatprep.subr.mxu0 0.0
  %516 = vmatpush1.msra.mxu0 0.0
  %517 = vmatprep.subr.mxu0 0.0
  %518 = vmatpush1.msra.mxu0 0.0
  %519 = vmatprep.subr.mxu0 0.0
  %520 = vmatpush1.msra.mxu0 0.0
  %521 = vmatprep.subr.mxu0 0.0
  %522 = vmatpush1.msra.mxu0 0.0
  %523 = vmatprep.subr.mxu0 0.0
  %524 = vmatpush1.msra.mxu0 0.0
  %525 = vmatprep.subr.mxu0 0.0
  %526 = vmatpush1.msra.mxu0 0.0
  %527 = vmatprep.subr.mxu0 0.0
  %528 = vmatpush1.msra.mxu0 0.0
  %529 = vmatprep.subr.mxu0 0.0
  %530 = vmatpush1.msra.mxu0 0.0
  %531 = vmatprep.subr.mxu0 0.0
  %532 = vmatpush1.msra.mxu0 0.0
  %533 = vmatprep.subr.mxu0 0.0
  %534 = vmatpush1.msra.mxu0 0.0
  %535 = vmatprep.subr.mxu0 0.0
  %536 = vmatpush1.msra.mxu0 0.0
  %537 = vmatprep.subr.mxu0 0.0
  %538 = vmatpush1.msra.mxu0 0.0
  %539 = vmatprep.subr.mxu0 0.0
  %540 = vmatpush1.msra.mxu0 0.0
  %541 = vmatprep.subr.mxu0 0.0
  %542 = vmatpush1.msra.mxu0 0.0
  %543 = vmatprep.subr.mxu0 0.0
  %544 = vmatpush1.msra.mxu0 0.0
  %545 = vmatprep.subr.mxu0 0.0
  %546 = vmatpush1.msra.mxu0 0.0
  %547 = vmatprep.subr.mxu0 0.0
  %548 = vmatpush1.msra.mxu0 0.0
  %549 = vmatprep.subr.mxu0 0.0
  %550 = vmatpush1.msra.mxu0 0.0
  %551 = vmatprep.mubr.f32.mxu0 0.0
  %552 = vmatmul.mubr.f32.gmra.mrb[0].mxu0 %v485
  %v553 = vpop.f32.mrb[0].mxu0
  %v554 = vadd.f32 0.0, %v553
  %v555 = vpop.f32.mrb[0].mxu0
  %556 = vdwg.mxu0
  %v557 = vadd.f32 %v480, %v554
  %558 = vset.pattern.permute.xlu0 45
  %559 = vperm.xlu0 %558, %v12
  %v560 = vpop.permute.xlu0 %559
  %v562 = vadd.f32 %v557, %v560
  %v563 = vmax.f32 %v562, 0.0
  %564 = vset.pattern.permute.xlu0 46
  %565 = vperm.xlu0 %564, %v12
  %v566 = vpop.permute.xlu0 %565
  %568 = vrot.lane.b32.xlu0 %v12, 92
  %v569 = vpop.permute.xlu0 %568
  %v570 = vsel %vm336, %v569, 0
  %572 = vmatprep.subr.mxu0 0.0
  %573 = vmatpush1.msra.mxu0 %v563
  %574 = vmatprep.subr.mxu0 0.0
  %575 = vmatpush1.msra.mxu0 0.0
  %576 = vmatprep.subr.mxu0 0.0
  %577 = vmatpush1.msra.mxu0 0.0
  %578 = vmatprep.subr.mxu0 0.0
  %579 = vmatpush1.msra.mxu0 0.0
  %580 = vmatprep.subr.mxu0 0.0
  %581 = vmatpush1.msra.mxu0 0.0
  %582 = vmatprep.subr.mxu0 0.0
  %583 = vmatpush1.msra.mxu0 0.0
  %584 = vmatprep.subr.mxu0 0.0
  %585 = vmatpush1.msra.mxu0 0.0
  %586 = vmatprep.subr.mxu0 0.0
  %587 = vmatpush1.msra.mxu0 0.0
  %588 = vmatprep.subr.mxu0 0.0
  %589 = vmatpush1.msra.mxu0 0.0
  %590 = vmatprep.subr.mxu0 0.0
  %591 = vmatpush1.msra.mxu0 0.0
  %592 = vmatprep.subr.mxu0 0.0
  %593 = vmatpush1.msra.mxu0 0.0
  %594 = vmatprep.subr.mxu0 0.0
  %595 = vmatpush1.msra.mxu0 0.0
  %596 = vmatprep.subr.mxu0 0.0
  %597 = vmatpush1.msra.mxu0 0.0
  %598 = vmatprep.subr.mxu0 0.0
  %599 = vmatpush1.msra.mxu0 0.0
  %600 = vmatprep.subr.mxu0 0.0
  %601 = vmatpush1.msra.mxu0 0.0
  %602 = vmatprep.subr.mxu0 0.0
  %603 = vmatpush1.msra.mxu0 0.0
  %604 = vmatprep.subr.mxu0 0.0
  %605 = vmatpush1.msra.mxu0 0.0
  %606 = vmatprep.subr.mxu0 0.0
  %607 = vmatpush1.msra.mxu0 0.0
  %608 = vmatprep.subr.mxu0 0.0
  %609 = vmatpush1.msra.mxu0 0.0
  %610 = vmatprep.subr.mxu0 0.0
  %611 = vmatpush1.msra.mxu0 0.0
  %612 = vmatprep.subr.mxu0 0.0
  %613 = vmatpush1.msra.mxu0 0.0
  %614 = vmatprep.subr.mxu0 0.0
  %615 = vmatpush1.msra.mxu0 0.0
  %616 = vmatprep.subr.mxu0 0.0
  %617 = vmatpush1.msra.mxu0 0.0
  %618 = vmatprep.subr.mxu0 0.0
  %619 = vmatpush1.msra.mxu0 0.0
  %620 = vmatprep.subr.mxu0 0.0
  %621 = vmatpush1.msra.mxu0 0.0
  %622 = vmatprep.subr.mxu0 0.0
  %623 = vmatpush1.msra.mxu0 0.0
  %624 = vmatprep.subr.mxu0 0.0
  %625 = vmatpush1.msra.mxu0 0.0
  %626 = vmatprep.subr.mxu0 0.0
  %627 = vmatpush1.msra.mxu0 0.0
  %628 = vmatprep.subr.mxu0 0.0
  %629 = vmatpush1.msra.mxu0 0.0
  %630 = vmatprep.subr.mxu0 0.0
  %631 = vmatpush1.msra.mxu0 0.0
  %632 = vmatprep.subr.mxu0 0.0
  %633 = vmatpush1.msra.mxu0 0.0
  %634 = vmatprep.subr.mxu0 0.0
  %635 = vmatpush1.msra.mxu0 0.0
  %636 = vmatprep.mubr.f32.mxu0 0.0
  %637 = vmatmul.mubr.f32.gmra.mrb[0].mxu0 %v570
  %v638 = vpop.f32.mrb[0].mxu0
  %v639 = vadd.f32 %v566, %v638
  %v640 = vpop.f32.mrb[0].mxu0
  %641 = vdwg.mxu0
  %642 = vst [vmem:[%s2] sm:$0xff] %v639
  // Predicated region
  $region10: #{cnn_pallas.1} parent=0 // pred_check
    _
  $region11: #{cnn_pallas.1} parent=0 // pred_check_branch
    %644 = sbr.rel (0) target = $region13
  $region12: #{cnn_pallas.1} parent=0 // pred_region
    _
  $region13: #{cnn_pallas.1} parent=0 // pred_fallthru
    _
  // Predicated region
  $region14: #{cnn_pallas.1} parent=0 // pred_check
    _
  $region15: #{cnn_pallas.1} parent=0 // pred_check_branch
    %646 = sbr.rel (0) target = $region17
  $region16: #{cnn_pallas.1} parent=0 // pred_region
    _
  $region17: #{cnn_pallas.1} parent=0 // pred_fallthru
    _

</llo_original>
